<compile_context>
chip_gen: v7x
topology: tpu7x:2x2x1
jax: 0.10.0
libtpu: 0.0.40
codegen_flags: <defaults>
</compile_context>

<pallas_src>
import functools

import jax
import jax.numpy as jnp
import numpy as np
from jax.experimental import pallas as pl
from jax.experimental.pallas import tpu as pltpu

LANES = 128


def _cenet_kernel(emb_ref, aux_ref, out_ref, *, E, FF, red, seg, rows):
    """Single-invocation CENet forward; all refs resident in VMEM.

    emb_ref : (rows, 128) lane-dense cat(embs, dim=0); row r, lanes
              [s*E, (s+1)*E) hold embedding cat-row k = r*seg + s.
    aux_ref : (E + red + FF, 128) packed constants:
                rows [0, E)             lanes [0, FF)  emb^T  (emb_flat[k, e] at [e, k])
                rows [E, E+red)         lanes [0, FF)  W1 with columns in cat order
                                        lane  FF       b1 column
                rows [E+red, E+red+FF)  lanes [0, red) W2 with rows in segment-major order
                                        lane  red      b2 column (segment-major)
    out_ref : (rows, 128) lane-dense attention-scaled slab.
    """
    # ---- AdaptiveMaxPool1d(1): max over the feature axis = one sublane reduce ----
    embT = aux_ref[0:E, :]                                      # (E, 128)
    pooled = jnp.max(embT[:, 0:FF], axis=0, keepdims=True)      # (1, FF), cat order

    # ---- fc layer 1: h = relu(W1 @ pooled + b1), contraction along lanes ----
    blk1 = aux_ref[E:E + red, :]                                # (red, 128)
    h = jnp.sum(blk1[:, 0:FF] * pooled, axis=1, keepdims=True) + blk1[:, FF:FF + 1]
    h = jnp.maximum(h, 0.0)                                     # (red, 1)

    # ---- move h from sublanes to lanes (single-vreg identity-mask reduce) ----
    ii = jax.lax.broadcasted_iota(jnp.int32, (red, red), 0)
    jj = jax.lax.broadcasted_iota(jnp.int32, (red, red), 1)
    h_row = jnp.sum(jnp.where(ii == jj, h, 0.0), axis=0, keepdims=True)  # (1, red)

    # ---- fc layer 2: attn = relu(W2 @ h + b2), segment-major sublane output ----
    blk2 = aux_ref[E + red:E + red + FF, :]                     # (FF, 128)
    attn = jnp.sum(blk2[:, 0:red] * h_row, axis=1, keepdims=True) + blk2[:, red:red + 1]
    attn = jnp.maximum(attn, 0.0)                               # (FF, 1), t = s*rows + r

    # ---- expand attn to the lane-dense layout, fused with the scaling ----
    attn_map = jnp.concatenate(
        [jnp.broadcast_to(attn[s * rows:(s + 1) * rows, :], (rows, E))
         for s in range(seg)], axis=1)                          # (rows, 128)
    out_ref[...] = attn_map * emb_ref[...]                      # one unmasked full store


def prepare_cenet_inputs(emb_all, w1, b1, w2, b2):
    """One-time (module-init / weight-load) packing; plain NumPy on the host."""
    emb_all = np.asarray(emb_all, dtype=np.float32)
    w1 = np.asarray(w1, dtype=np.float32)
    b1 = np.asarray(b1, dtype=np.float32)
    w2 = np.asarray(w2, dtype=np.float32)
    b2 = np.asarray(b2, dtype=np.float32)

    F, F2, E = emb_all.shape
    assert F == F2
    FF = F * F
    red = w1.shape[0]
    # Lane-dense packing requires E | 128; fc sizes must fit one lane vector.
    # TODO(synk): generalize the lane packing for feature_dim values that do not divide 128.
    assert LANES % E == 0 and (FF * E) % LANES == 0
    seg = LANES // E
    rows = FF // seg
    assert rows % 8 == 0 and FF + 1 <= LANES and red + 1 <= LANES

    emb_flat = emb_all.reshape(FF, E)                 # cat order k = j*F + i
    emb_lane = emb_flat.reshape(rows, LANES)          # row r, seg s  <->  k = r*seg + s

    # fc input m = i*F + j  <->  cat order k = j*F + i (involution).
    perm = (np.arange(FF) % F) * F + np.arange(FF) // F
    # segment-major t = s*rows + r  <->  cat order k = r*seg + s.
    t = np.arange(FF)
    sigma = (t % rows) * seg + t // rows

    aux = np.zeros((E + red + FF, LANES), dtype=np.float32)
    aux[0:E, 0:FF] = emb_flat.T                       # pooling copy (E on sublanes)
    aux[E:E + red, 0:FF] = w1[:, perm]                # W1, cat-order columns
    aux[E:E + red, FF] = b1
    aux[E + red:E + red + FF, 0:red] = w2[sigma, :]   # W2, segment-major rows
    aux[E + red:E + red + FF, red] = b2[sigma]

    return jnp.asarray(emb_lane), jnp.asarray(aux)


@functools.partial(jax.jit, static_argnames=("F", "E", "red"))
def cenet_forward(emb_lane, aux, *, F, E, red):
    FF = F * F
    seg = LANES // E
    rows = FF // seg
    kernel = functools.partial(_cenet_kernel, E=E, FF=FF, red=red, seg=seg, rows=rows)
    out_lane = pl.pallas_call(
        kernel,
        out_shape=jax.ShapeDtypeStruct((rows, LANES), jnp.float32),
        in_specs=[pl.BlockSpec(memory_space=pltpu.MemorySpace.VMEM),
                  pl.BlockSpec(memory_space=pltpu.MemorySpace.VMEM)],
        out_specs=pl.BlockSpec(memory_space=pltpu.MemorySpace.VMEM),
    )(emb_lane, aux)
    # (rows, 128) row-major == (FF, E) row-major: this reshape is free (metadata only).
    return out_lane.reshape(F, F, E)


def cenet_reference(emb_all, w1, b1, w2, b2):
    """Pure-JAX reference mirroring the PyTorch forward exactly."""
    F, _, E = emb_all.shape
    FF = F * F
    pooled = jnp.max(emb_all, axis=-1)           # pooled[j, i] = max_e embedding_j[i, e]
    fc_in = pooled.T.reshape(FF)                 # flatten(cat(pool_embs, dim=-1))
    h = jnp.maximum(fc_in @ w1.T + b1, 0.0)
    attn = jnp.maximum(h @ w2.T + b2, 0.0)
    embs = emb_all.reshape(FF, E)                # cat(embs, dim=0)
    return (attn[:, None] * embs).reshape(F, F, E)


if __name__ == "__main__":
    # Small shapes consistent with the module.
    num_fields = 8       # F
    feature_dim = 32     # E
    reduction = 8
    FF = num_fields * num_fields
    red = FF // reduction

    key = jax.random.PRNGKey(0)
    k_emb, k_w1, k_b1, k_w2, k_b2 = jax.random.split(key, 5)

    # nn.Embedding(num_fields, feature_dim) per field, init normal(0, 0.001).
    emb_all = 0.001 * jax.random.normal(
        k_emb, (num_fields, num_fields, feature_dim), dtype=jnp.float32)

    # fc parameters (deterministic synthetic init; weight_init undefined upstream).
    w1 = 0.05 * jax.random.normal(k_w1, (red, FF), dtype=jnp.float32)
    b1 = 0.05 * jax.random.normal(k_b1, (red,), dtype=jnp.float32)
    w2 = 0.05 * jax.random.normal(k_w2, (FF, red), dtype=jnp.float32)
    b2 = 0.05 * jax.random.normal(k_b2, (FF,), dtype=jnp.float32)

    # One-time packing (module init); the forward path is just the pallas_call.
    emb_lane, aux = prepare_cenet_inputs(emb_all, w1, b1, w2, b2)

    out = jax.block_until_ready(
        cenet_forward(emb_lane, aux, F=num_fields, E=feature_dim, red=red))

    ref = cenet_reference(emb_all, w1, b1, w2, b2)
    assert out.shape == (num_fields, num_fields, feature_dim)
    assert jnp.allclose(out, ref, atol=1e-6, rtol=1e-5), "Pallas output mismatch vs reference"

    print("KERNEL_OK")
</pallas_src>

<mosaic_0001>
module attributes {stable_mosaic.version = 11 : i64} {
  func.func @_cenet_kernel(%arg0: memref<16x128xf32, #tpu.memory_space<vmem>>, %arg1: memref<104x128xf32, #tpu.memory_space<vmem>>, %arg2: memref<16x128xf32, #tpu.memory_space<vmem>>) attributes {dimension_semantics = [], scalar_prefetch = 0 : i64, scratch_operands = 0 : i64, tpu.core_type = #tpu.core_type<tc>} {
    %c0 = arith.constant 0 : index
    %c0_0 = arith.constant 0 : index
    %0 = vector.load %arg1[%c0, %c0_0] : memref<104x128xf32, #tpu.memory_space<vmem>>, vector<32x128xf32>
    %1 = vector.extract_strided_slice %0 {offsets = [0, 0], sizes = [32, 64], strides = [1, 1]} : vector<32x128xf32> to vector<32x64xf32>
    %cst = arith.constant dense<0xFF800000> : vector<64xf32>
    %2 = vector.multi_reduction <maximumf>, %1, %cst [0] : vector<32x64xf32> to vector<64xf32>
    %3 = vector.shape_cast %2 : vector<64xf32> to vector<1x64xf32>
    %c32 = arith.constant 32 : index
    %c0_1 = arith.constant 0 : index
    %4 = vector.load %arg1[%c32, %c0_1] : memref<104x128xf32, #tpu.memory_space<vmem>>, vector<8x128xf32>
    %5 = vector.extract_strided_slice %4 {offsets = [0, 0], sizes = [8, 64], strides = [1, 1]} : vector<8x128xf32> to vector<8x64xf32>
    %6 = vector.broadcast %3 : vector<1x64xf32> to vector<8x64xf32>
    %7 = arith.mulf %5, %6 : vector<8x64xf32>
    %cst_2 = arith.constant dense<0.000000e+00> : vector<8xf32>
    %8 = vector.multi_reduction <add>, %7, %cst_2 [1] : vector<8x64xf32> to vector<8xf32>
    %9 = vector.shape_cast %8 : vector<8xf32> to vector<8x1xf32>
    %10 = vector.extract_strided_slice %4 {offsets = [0, 64], sizes = [8, 1], strides = [1, 1]} : vector<8x128xf32> to vector<8x1xf32>
    %11 = arith.addf %9, %10 : vector<8x1xf32>
    %cst_3 = arith.constant 0.000000e+00 : f32
    %12 = vector.broadcast %cst_3 : f32 to vector<8x1xf32>
    %13 = arith.maximumf %11, %12 : vector<8x1xf32>
    %14 = tpu.iota {dimensions = array<i32: 0>} : vector<8x8xi32>
    %15 = tpu.iota {dimensions = array<i32: 1>} : vector<8x8xi32>
    %16 = arith.cmpi eq, %14, %15 : vector<8x8xi32>
    %cst_4 = arith.constant 0.000000e+00 : f32
    %17 = vector.shape_cast %13 : vector<8x1xf32> to vector<8x1xf32>
    %18 = vector.broadcast %17 : vector<8x1xf32> to vector<8x8xf32>
    %19 = vector.broadcast %cst_4 : f32 to vector<8x8xf32>
    %20 = arith.select %16, %18, %19 : vector<8x8xi1>, vector<8x8xf32>
    %cst_5 = arith.constant dense<0.000000e+00> : vector<8xf32>
    %21 = vector.multi_reduction <add>, %20, %cst_5 [0] : vector<8x8xf32> to vector<8xf32>
    %22 = vector.shape_cast %21 : vector<8xf32> to vector<1x8xf32>
    %c40 = arith.constant 40 : index
    %c0_6 = arith.constant 0 : index
    %23 = vector.load %arg1[%c40, %c0_6] : memref<104x128xf32, #tpu.memory_space<vmem>>, vector<64x128xf32>
    %24 = vector.extract_strided_slice %23 {offsets = [0, 0], sizes = [64, 8], strides = [1, 1]} : vector<64x128xf32> to vector<64x8xf32>
    %25 = vector.broadcast %22 : vector<1x8xf32> to vector<64x8xf32>
    %26 = arith.mulf %24, %25 : vector<64x8xf32>
    %cst_7 = arith.constant dense<0.000000e+00> : vector<64xf32>
    %27 = vector.multi_reduction <add>, %26, %cst_7 [1] : vector<64x8xf32> to vector<64xf32>
    %28 = vector.shape_cast %27 : vector<64xf32> to vector<64x1xf32>
    %29 = vector.extract_strided_slice %23 {offsets = [0, 8], sizes = [64, 1], strides = [1, 1]} : vector<64x128xf32> to vector<64x1xf32>
    %30 = arith.addf %28, %29 : vector<64x1xf32>
    %cst_8 = arith.constant 0.000000e+00 : f32
    %31 = vector.broadcast %cst_8 : f32 to vector<64x1xf32>
    %32 = arith.maximumf %30, %31 : vector<64x1xf32>
    %33 = vector.extract_strided_slice %32 {offsets = [0, 0], sizes = [16, 1], strides = [1, 1]} : vector<64x1xf32> to vector<16x1xf32>
    %34 = vector.shape_cast %33 : vector<16x1xf32> to vector<16x1xf32>
    %35 = vector.broadcast %34 : vector<16x1xf32> to vector<16x32xf32>
    %36 = vector.extract_strided_slice %32 {offsets = [16, 0], sizes = [16, 1], strides = [1, 1]} : vector<64x1xf32> to vector<16x1xf32>
    %37 = vector.shape_cast %36 : vector<16x1xf32> to vector<16x1xf32>
    %38 = vector.broadcast %37 : vector<16x1xf32> to vector<16x32xf32>
    %39 = vector.extract_strided_slice %32 {offsets = [32, 0], sizes = [16, 1], strides = [1, 1]} : vector<64x1xf32> to vector<16x1xf32>
    %40 = vector.shape_cast %39 : vector<16x1xf32> to vector<16x1xf32>
    %41 = vector.broadcast %40 : vector<16x1xf32> to vector<16x32xf32>
    %42 = vector.extract_strided_slice %32 {offsets = [48, 0], sizes = [16, 1], strides = [1, 1]} : vector<64x1xf32> to vector<16x1xf32>
    %43 = vector.shape_cast %42 : vector<16x1xf32> to vector<16x1xf32>
    %44 = vector.broadcast %43 : vector<16x1xf32> to vector<16x32xf32>
    %45 = tpu.concatenate %35, %38, %41, %44 in 1 : vector<16x32xf32>, vector<16x32xf32>, vector<16x32xf32>, vector<16x32xf32> -> vector<16x128xf32>
    %c0_9 = arith.constant 0 : index
    %c0_10 = arith.constant 0 : index
    %46 = vector.load %arg0[%c0_9, %c0_10] : memref<16x128xf32, #tpu.memory_space<vmem>>, vector<16x128xf32>
    %47 = arith.mulf %45, %46 : vector<16x128xf32>
    %c0_11 = arith.constant 0 : index
    %c0_12 = arith.constant 0 : index
    %48 = vector.load %arg2[%c0_11, %c0_12] : memref<16x128xf32, #tpu.memory_space<vmem>>, vector<16x128xf32>
    tpu.vector_store %arg2[%c0_11, %c0_12], %47 {strides = array<i32>} : memref<16x128xf32, #tpu.memory_space<vmem>>, vector<16x128xf32>,
    return
  }
}

</mosaic_0001>

<llo_original>
// kernel: cenet_forward.1
$region0: #{cenet_forward.1}
  #allocation0 [shape = 'u32[]', space=smem, size = 0x4, offset = 0x4, fixed_abs, tag = 'smem constant byte address 0x4 - core index']
  #allocation1 [shape = 'u32[144,128]{1,0:T(1,128)}', space=vmem, size = 0x12000, scoped, tag = 'internal scratch']
  %s0 = inlined_call_operand.hbm [shape: f32[16,128], index: 0, kind: input, shape index: {}]
  %s1 = inlined_call_operand.hbm [shape: f32[104,128], index: 1, kind: input, shape index: {}]
  %s2 = inlined_call_operand.vmem [shape: f32[16,128], index: 2, kind: output, shape index: {}]
  %s3 = sld [smem:[#allocation0]]
  $region26: #{cenet_forward.1} parent=0
    _
  %s5 = ssub.s32 1, %s3
  %s6 = scalar_select 0, %s5, %s3
  $region1: #{cenet_forward.1} parent=0
    #allocation2 [shape = 'u8[8192]{0}', space=vmem, size = 0x2000, scoped, tag = 'input window, operand 0, single buffered']
    #allocation3 [shape = 's32[1]{0}', space=sflag, size = 0x4, scoped, tag = 'scoped memory for cenet_forward.1']
    #allocation4 [shape = 'u8[53248]{0}', space=vmem, size = 0xd000, scoped, tag = 'input window, operand 1, single buffered']
    #allocation5 [shape = 's32[1]{0}', space=sflag, size = 0x4, scoped, tag = 'scoped memory for cenet_forward.1']
    %7 = vsyncpa [#allocation3], 0
    %8 = vsyncpa [#allocation5], 0
    // Predicated region
    $region2: #{cenet_forward.1} parent=1 // pred_check
      _
    $region3: #{cenet_forward.1} parent=1 // pred_check_branch
      %10 = sbr.rel (0) target = $region5
    $region4: #{cenet_forward.1} parent=1 // pred_region
      %s12 = ssub.s32 256, 256
      %13 = vsyncadd [#allocation3], %s12
      %s14 = sshll.u32 [#allocation2], 4
      %s15 = int_to_ptr.vmem [resolvable:$true] %s14
      %20 = dma.hbm_to_vmem [thread:$0]  %s0, 256, %s15, [#allocation3], 128, 128, 8
    $region5: #{cenet_forward.1} parent=1 // pred_fallthru
      _
    // Predicated region
    $region6: #{cenet_forward.1} parent=1 // pred_check
      _
    $region7: #{cenet_forward.1} parent=1 // pred_check_branch
      %22 = sbr.rel (0) target = $region9
    $region8: #{cenet_forward.1} parent=1 // pred_region
      %s24 = ssub.s32 1664, 1664
      %25 = vsyncadd [#allocation5], %s24
      %s26 = sshll.u32 [#allocation4], 4
      %s27 = int_to_ptr.vmem [resolvable:$true] %s26
      %32 = dma.hbm_to_vmem [thread:$0]  %s1, 1664, %s27, [#allocation5], 128, 128, 8
    $region9: #{cenet_forward.1} parent=1 // pred_fallthru
      _
    // Predicated region
    $region10: #{cenet_forward.1} parent=1 // pred_check
      _
    $region11: #{cenet_forward.1} parent=1 // pred_check_branch
      %34 = sbr.rel (0) target = $region13
    $region12: #{cenet_forward.1} parent=1 // pred_region
      %35 = dma.done [#allocation3], 256
    $region13: #{cenet_forward.1} parent=1 // pred_fallthru
      _
    // Predicated region
    $region14: #{cenet_forward.1} parent=1 // pred_check
      _
    $region15: #{cenet_forward.1} parent=1 // pred_check_branch
      %37 = sbr.rel (0) target = $region17
    $region16: #{cenet_forward.1} parent=1 // pred_region
      %38 = dma.done [#allocation5], 1664
    $region17: #{cenet_forward.1} parent=1 // pred_fallthru
      _
    %v39 = vld [vmem:[#allocation4] sm:$0xff]
    %v40 = vld [vmem:[#allocation4 + $0x8] sm:$0xff]
    %v41 = vld [vmem:[#allocation4 + $0x10] sm:$0xff]
    %v42 = vld [vmem:[#allocation4 + $0x18] sm:$0xff]
    %vm43 = vcmask 523264
    %v44 = vsel %vm43, %v39, -inf
    %v45 = vsel %vm43, %v40, -inf
    %v46 = vsel %vm43, %v41, -inf
    %v47 = vsel %vm43, %v42, -inf
    %v48 = vmax.f32 %v44, %v45
    %v49 = vmax.f32 %v46, %v47
    %v50 = vmax.f32 %v48, %v49
    %v51 = vrot.slane %v50, 4
    %v52 = vmax.f32 %v50, %v51
    %v53 = vrot.slane %v52, 2
    %v54 = vmax.f32 %v52, %v53
    %v55 = vrot.slane %v54, 1
    %v56 = vmax.f32 %v54, %v55
    %v57 = vld [vmem:[#allocation4 + $0x20] sm:$0xff]
    %v58 = vmul.f32 %v57, %v56
    %v59 = vsel %vm43, %v58, 0.0
    %60 = vadd.xlane.f32.xlu0 %v59
    %v61 = vpop.xlane.xlu0 %60
    %v62 = vadd.f32 %v61, %v57
    %v63 = vmax.f32 %v62, 0.0
    %v64 = vlaneseq
    %v65 = vshrl.u32 %v64, 7
    %v66 = vlaneseq
    %v67 = vand.u32 %v66, 127
    %vm68 = vcmp.eq.s32.totalorder %v65, %v67
    %70 = vset.pattern.permute.xlu0 64
    %71 = vperm.xlu0 %70, %v63
    %v72 = vpop.permute.xlu0 %71
    %v74 = vsel %vm68, %v72, 0.0
    %vm75 = vcmask 64512
    %v76 = vsel %vm75, %v74, 0.0
    %v77 = vrot.slane %v76, 4
    %v78 = vadd.f32 %v76, %v77
    %v79 = vrot.slane %v78, 2
    %v80 = vadd.f32 %v78, %v79
    %v81 = vrot.slane %v80, 1
    %v82 = vadd.f32 %v80, %v81
    %v83 = vld [vmem:[#allocation4 + $0x28] sm:$0xff]
    %v84 = vld [vmem:[#allocation4 + $0x30] sm:$0xff]
    %v85 = vld [vmem:[#allocation4 + $0x38] sm:$0xff]
    %v86 = vld [vmem:[#allocation4 + $0x40] sm:$0xff]
    %v87 = vld [vmem:[#allocation4 + $0x48] sm:$0xff]
    %v88 = vld [vmem:[#allocation4 + $0x50] sm:$0xff]
    %v89 = vld [vmem:[#allocation4 + $0x58] sm:$0xff]
    %v90 = vld [vmem:[#allocation4 + $0x60] sm:$0xff]
    %v91 = vmul.f32 %v83, %v82
    %v92 = vmul.f32 %v84, %v82
    %v93 = vmul.f32 %v85, %v82
    %v94 = vmul.f32 %v86, %v82
    %v95 = vmul.f32 %v87, %v82
    %v96 = vmul.f32 %v88, %v82
    %v97 = vmul.f32 %v89, %v82
    %v98 = vmul.f32 %v90, %v82
    %v99 = vsel %vm75, %v91, 0.0
    %100 = vadd.xlane.f32.xlu0 %v99
    %v101 = vpop.xlane.xlu0 %100
    %v102 = vsel %vm75, %v92, 0.0
    %103 = vadd.xlane.f32.xlu0 %v102
    %v104 = vpop.xlane.xlu0 %103
    %v105 = vsel %vm75, %v93, 0.0
    %106 = vadd.xlane.f32.xlu0 %v105
    %v107 = vpop.xlane.xlu0 %106
    %v108 = vsel %vm75, %v94, 0.0
    %109 = vadd.xlane.f32.xlu0 %v108
    %v110 = vpop.xlane.xlu0 %109
    %v111 = vsel %vm75, %v95, 0.0
    %112 = vadd.xlane.f32.xlu0 %v111
    %v113 = vpop.xlane.xlu0 %112
    %v114 = vsel %vm75, %v96, 0.0
    %115 = vadd.xlane.f32.xlu0 %v114
    %v116 = vpop.xlane.xlu0 %115
    %v117 = vsel %vm75, %v97, 0.0
    %118 = vadd.xlane.f32.xlu0 %v117
    %v119 = vpop.xlane.xlu0 %118
    %v120 = vsel %vm75, %v98, 0.0
    %121 = vadd.xlane.f32.xlu0 %v120
    %v122 = vpop.xlane.xlu0 %121
    %v123 = vadd.f32 %v101, %v83
    %v124 = vadd.f32 %v104, %v84
    %v125 = vadd.f32 %v107, %v85
    %v126 = vadd.f32 %v110, %v86
    %v127 = vadd.f32 %v113, %v87
    %v128 = vadd.f32 %v116, %v88
    %v129 = vadd.f32 %v119, %v89
    %v130 = vadd.f32 %v122, %v90
    %v131 = vmax.f32 %v123, 0.0
    %v132 = vmax.f32 %v124, 0.0
    %v133 = vmax.f32 %v125, 0.0
    %v134 = vmax.f32 %v126, 0.0
    %v135 = vmax.f32 %v127, 0.0
    %v136 = vmax.f32 %v128, 0.0
    %v137 = vmax.f32 %v129, 0.0
    %v138 = vmax.f32 %v130, 0.0
    %140 = vset.pattern.permute.xlu0 8
    %141 = vperm.xlu0 %140, %v131
    %v142 = vpop.permute.xlu0 %141
    %145 = vset.pattern.permute.xlu0 8
    %146 = vperm.xlu0 %145, %v132
    %v147 = vpop.permute.xlu0 %146
    %150 = vset.pattern.permute.xlu0 8
    %151 = vperm.xlu0 %150, %v133
    %v152 = vpop.permute.xlu0 %151
    %155 = vset.pattern.permute.xlu0 8
    %156 = vperm.xlu0 %155, %v134
    %v157 = vpop.permute.xlu0 %156
    %160 = vset.pattern.permute.xlu0 8
    %161 = vperm.xlu0 %160, %v135
    %v162 = vpop.permute.xlu0 %161
    %165 = vset.pattern.permute.xlu0 8
    %166 = vperm.xlu0 %165, %v136
    %v167 = vpop.permute.xlu0 %166
    %170 = vset.pattern.permute.xlu0 8
    %171 = vperm.xlu0 %170, %v137
    %v172 = vpop.permute.xlu0 %171
    %175 = vset.pattern.permute.xlu0 8
    %176 = vperm.xlu0 %175, %v138
    %v177 = vpop.permute.xlu0 %176
    %vm179 = vcmask 261120
    %v180 = vsel %vm179, %v142, %v152
    %v181 = vsel %vm179, %v147, %v157
    %v182 = vsel %vm43, %v180, %v162
    %v183 = vsel %vm43, %v181, %v167
    %vm184 = vcmask 785408
    %v185 = vsel %vm184, %v182, %v172
    %v186 = vsel %vm184, %v183, %v177
    %v187 = vld [vmem:[#allocation2] sm:$0xff]
    %v188 = vld [vmem:[#allocation2 + $0x8] sm:$0xff]
    %v189 = vmul.f32 %v185, %v187
    %v190 = vmul.f32 %v186, %v188
    %191 = vst [vmem:[%s2] sm:$0xff] %v189
    %192 = vst [vmem:[%s2 + $0x8] sm:$0xff] %v190
    // Predicated region
    $region18: #{cenet_forward.1} parent=1 // pred_check
      _
    $region19: #{cenet_forward.1} parent=1 // pred_check_branch
      %194 = sbr.rel (0) target = $region21
    $region20: #{cenet_forward.1} parent=1 // pred_region
      _
    $region21: #{cenet_forward.1} parent=1 // pred_fallthru
      _
    // Predicated region
    $region22: #{cenet_forward.1} parent=1 // pred_check
      _
    $region23: #{cenet_forward.1} parent=1 // pred_check_branch
      %196 = sbr.rel (0) target = $region25
    $region24: #{cenet_forward.1} parent=1 // pred_region
      _
    $region25: #{cenet_forward.1} parent=1 // pred_fallthru
      _
    %197 = vsyncpa [#allocation3], 1
    %198 = vsyncpa [#allocation5], 1

</llo_original>
